<compile_context>
chip_gen: v5e
topology: v5e:2x2
jax: 0.10.0
libtpu: 0.0.40
codegen_flags: <defaults>
</compile_context>

<pallas_src>
import functools

import jax
import jax.numpy as jnp
from jax import lax
from jax.experimental import pallas as pl
from jax.experimental.pallas import tpu as pltpu


def _round_up(x, m):
    return (x + m - 1) // m * m


def _pad_to(x, shape):
    pads = [(0, t - s) for s, t in zip(x.shape, shape)]
    if all(p == (0, 0) for p in pads):
        return x
    return jnp.pad(x, pads)


def _attention_kernel(q_ref, k_ref, v_ref,
                      out_ref, attn_ref, logattn_ref,
                      *, inv_temperature, lk_valid):
    # Block shapes: q (1, TILE_Q, D), k (1, Lk_pad, D), v (1, Lk_pad, Dv_pad).
    q = q_ref[0]            # (TILE_Q, D)   native dtype feeds the MXU
    k = k_ref[0]            # (Lk_pad, D)
    v = v_ref[0]            # (Lk_pad, Dv_pad)

    # Fold temperature into q (Lq*D multiply instead of Lq*Lk divide).
    q_scaled = q * inv_temperature

    # scores = q @ k^T via dot_general contracting the last dims of both
    # operands; f32 accumulation on the MXU.
    scores = lax.dot_general(
        q_scaled, k,
        dimension_numbers=(((1,), (1,)), ((), ())),
        preferred_element_type=jnp.float32)          # (TILE_Q, Lk_pad), f32

    # Mask padded key columns (static check; no-op when Lk is 128-aligned).
    lk_pad = scores.shape[-1]
    if lk_valid < lk_pad:
        col = lax.broadcasted_iota(jnp.int32, scores.shape, 1)
        scores = jnp.where(col < lk_valid, scores, -1e30)

    # Numerically stable softmax / log_softmax along the last axis, in f32.
    m = jnp.max(scores, axis=-1, keepdims=True)
    shifted = scores - m
    e = jnp.exp(shifted)
    denom = jnp.sum(e, axis=-1, keepdims=True)

    # Store log_attn first: 'scores'/'shifted' die here, trimming the peak
    # f32 live set before the attn / output work.
    logattn_ref[0] = (shifted - jnp.log(denom)).astype(logattn_ref.dtype)

    attn = e * pl.reciprocal(denom, approx=False)    # exact reciprocal (EUP)
    attn_ref[0] = attn.astype(attn_ref.dtype)

    out = jnp.dot(attn.astype(v.dtype), v, preferred_element_type=jnp.float32)
    out_ref[0] = out.astype(out_ref.dtype)


def _pick_max_tile(Lk_pad, D, Dv_pad, in_item, out_item, attn_item,
                   kv_buffers, vmem_budget):
    """Largest TILE_Q whose per-step working set fits the VMEM budget."""
    kv_bytes = kv_buffers * Lk_pad * (D + Dv_pad) * in_item
    for t in (512, 256, 128, 64, 32, 16, 8):
        per_row = (2 * D * in_item                 # q block, double-buffered
                   + 2 * Dv_pad * out_item         # out block, double-buffered
                   + 2 * 2 * Lk_pad * attn_item    # attn + log_attn blocks
                   + 2 * Lk_pad * 4)               # live f32 softmax intermediates
        if kv_bytes + t * per_row <= vmem_budget:
            return t
    return 8


def _pick_tile_q(Lq, max_tile):
    """TILE_Q <= max_tile that minimizes padded q rows + per-step overhead."""
    Lq8 = _round_up(Lq, 8)
    if Lq8 <= max_tile:
        return Lq8
    best_t, best_cost = 8, None
    t = 8
    while t <= max_tile:
        lq_pad = _round_up(Lq, t)
        n_steps = lq_pad // t
        # cost in "rows written": padded rows are wasted store BW; each grid
        # step costs roughly as much as ~8 rows of store overhead.
        cost = lq_pad + 8 * n_steps
        if best_cost is None or cost < best_cost or (cost == best_cost and t > best_t):
            best_t, best_cost = t, cost
        t *= 2
    return best_t


def scaled_dot_product_attention2(q, k, v, temperature, *, attn_dtype=None):
    """Pallas implementation of ScaledDotProductAttention2.forward (eval mode).

    attn_dtype: dtype for the attn / log_attn outputs.  Default q.dtype
    (reference-exact); jnp.bfloat16 halves the dominant HBM writeback.
    """
    B, Lq, D = q.shape
    Bk, Lk, Dk = k.shape
    Bv, Lkv, Dv = v.shape
    assert Bk == B and Bv == B and Dk == D and Lkv == Lk

    out_dtype = q.dtype
    if attn_dtype is None:
        attn_dtype = q.dtype

    in_item = jnp.dtype(q.dtype).itemsize
    out_item = jnp.dtype(out_dtype).itemsize
    attn_item = jnp.dtype(attn_dtype).itemsize

    # --- lane-dense padding of the key / value axes -------------------------
    Lk_pad = _round_up(Lk, 128)            # lane-dense attn/log_attn stores
    Dv_pad = _round_up(Dv, 128)            # lane-dense output stores

    # --- generation-aware VMEM budget & tile selection ----------------------
    try:
        vmem_capacity = int(pltpu.get_tpu_info().vmem_capacity_bytes)
    except Exception:
        vmem_capacity = 64 * 1024 * 1024   # conservative fallback (v7x-sized)
    vmem_limit = int(vmem_capacity * 0.75)      # 96 MiB on v5e/v6e, 48 MiB on v7x
    vmem_budget = int(vmem_limit * 0.7)         # headroom for compiler scratch

    # Single-buffer the resident k/v blocks when double-buffering them would
    # burn meaningful VMEM (their block index changes once per batch only).
    kv_double_bytes = 2 * Lk_pad * (D + Dv_pad) * in_item
    single_buffer_kv = kv_double_bytes > (4 * 1024 * 1024)
    kv_buffers = 1 if single_buffer_kv else 2

    max_tile = _pick_max_tile(Lk_pad, D, Dv_pad, in_item, out_item, attn_item,
                              kv_buffers, vmem_budget)
    TILE_Q = _pick_tile_q(Lq, max_tile)
    Lq_pad = _round_up(Lq, TILE_Q)

    # --- pad inputs (no-ops when already aligned) ---------------------------
    q_p = _pad_to(q, (B, Lq_pad, D))
    k_p = _pad_to(k, (B, Lk_pad, D))       # zero-padded keys -> masked in-kernel
    v_p = _pad_to(v, (B, Lk_pad, Dv_pad))  # zero-padded values -> zero out cols

    kernel = functools.partial(
        _attention_kernel,
        inv_temperature=1.0 / float(temperature),
        lk_valid=Lk)

    out_shapes = (
        jax.ShapeDtypeStruct((B, Lq_pad, Dv_pad), out_dtype),    # output
        jax.ShapeDtypeStruct((B, Lq_pad, Lk_pad), attn_dtype),   # attn
        jax.ShapeDtypeStruct((B, Lq_pad, Lk_pad), attn_dtype),   # log_attn
    )

    kv_spec_kwargs = {}
    if single_buffer_kv:
        kv_spec_kwargs = dict(pipeline_mode=pl.Buffered(1))

    num_q_tiles = Lq_pad // TILE_Q
    grid_spec = pltpu.PrefetchScalarGridSpec(
        num_scalar_prefetch=0,
        grid=(B, num_q_tiles),
        in_specs=[
            pl.BlockSpec((1, TILE_Q, D), lambda b, qi: (b, qi, 0)),
            pl.BlockSpec((1, Lk_pad, D), lambda b, qi: (b, 0, 0),
                         **kv_spec_kwargs),                       # resident
            pl.BlockSpec((1, Lk_pad, Dv_pad), lambda b, qi: (b, 0, 0),
                         **kv_spec_kwargs),                       # resident
        ],
        out_specs=[
            pl.BlockSpec((1, TILE_Q, Dv_pad), lambda b, qi: (b, qi, 0)),
            pl.BlockSpec((1, TILE_Q, Lk_pad), lambda b, qi: (b, qi, 0)),
            pl.BlockSpec((1, TILE_Q, Lk_pad), lambda b, qi: (b, qi, 0)),
        ],
    )

    out, attn, log_attn = pl.pallas_call(
        kernel,
        out_shape=out_shapes,
        grid_spec=grid_spec,
        compiler_params=pltpu.CompilerParams(
            dimension_semantics=("parallel", "parallel"),
            vmem_limit_bytes=vmem_limit,
        ),
    )(q_p, k_p, v_p)

    # Slice padding back off (skipped entirely when already aligned, so the
    # writeback-bound outputs don't pay an extra read+write HBM pass).
    if Lq_pad != Lq or Dv_pad != Dv:
        out = out[:, :Lq, :Dv]
    if Lq_pad != Lq or Lk_pad != Lk:
        attn = attn[:, :Lq, :Lk]
        log_attn = log_attn[:, :Lq, :Lk]
    return out, attn, log_attn


def _reference(q, k, v, temperature):
    """Pure-JAX reference mirroring the PyTorch forward (eval mode)."""
    attn = jnp.einsum("bqd,bkd->bqk", q, k) / temperature
    log_attn = jax.nn.log_softmax(attn, axis=2)
    attn = jax.nn.softmax(attn, axis=2)
    out = jnp.einsum("bqk,bkd->bqd", attn, v)
    return out, attn, log_attn


if __name__ == "__main__":
    key = jax.random.PRNGKey(0)
    kq, kk, kv = jax.random.split(key, 3)

    # Small shapes consistent with the module: batched seq attention.
    B, Lq, Lk, D, Dv = 2, 8, 8, 32, 32
    temperature = float(D) ** 0.5  # typical choice: sqrt(d_k)

    q = jax.random.normal(kq, (B, Lq, D), dtype=jnp.float32)
    k = jax.random.normal(kk, (B, Lk, D), dtype=jnp.float32)
    v = jax.random.normal(kv, (B, Lk, Dv), dtype=jnp.float32)

    out, attn, log_attn = scaled_dot_product_attention2(q, k, v, temperature)
    jax.block_until_ready((out, attn, log_attn))

    # Sanity check against the pure-JAX reference.
    ref_out, ref_attn, ref_log_attn = _reference(q, k, v, temperature)
    assert jnp.allclose(out, ref_out, atol=1e-5, rtol=1e-5)
    assert jnp.allclose(attn, ref_attn, atol=1e-5, rtol=1e-5)
    assert jnp.allclose(log_attn, ref_log_attn, atol=1e-5, rtol=1e-5)

    print("KERNEL_OK")
</pallas_src>

<mosaic_0001>
module attributes {stable_mosaic.version = 11 : i64} {
  func.func @_attention_kernel(%arg0: i32, %arg1: i32, %arg2: memref<1x8x32xf32, #tpu.memory_space<vmem>>, %arg3: memref<1x128x32xf32, #tpu.memory_space<vmem>>, %arg4: memref<1x128x128xf32, #tpu.memory_space<vmem>>, %arg5: memref<1x8x128xf32, #tpu.memory_space<vmem>>, %arg6: memref<1x8x128xf32, #tpu.memory_space<vmem>>, %arg7: memref<1x8x128xf32, #tpu.memory_space<vmem>>) attributes {dimension_semantics = [#tpu.dimension_semantics<parallel>, #tpu.dimension_semantics<parallel>], iteration_bounds = array<i64: 2, 1>, scalar_prefetch = 0 : i64, scratch_operands = 0 : i64, tpu.core_type = #tpu.core_type<tc>, window_params = [{transform_indices = @transform_0, window_bounds = array<i64: 1, 8, 32>}, {transform_indices = @transform_1, window_bounds = array<i64: 1, 128, 32>}, {transform_indices = @transform_2, window_bounds = array<i64: 1, 128, 128>}, {transform_indices = @transform_3, window_bounds = array<i64: 1, 8, 128>}, {transform_indices = @transform_4, window_bounds = array<i64: 1, 8, 128>}, {transform_indices = @transform_5, window_bounds = array<i64: 1, 8, 128>}]} {
    %c0 = arith.constant 0 : index
    %c0_0 = arith.constant 0 : index
    %c0_1 = arith.constant 0 : index
    %0 = vector.load %arg2[%c0, %c0_0, %c0_1] : memref<1x8x32xf32, #tpu.memory_space<vmem>>, vector<1x8x32xf32>
    %1 = vector.shape_cast %0 : vector<1x8x32xf32> to vector<8x32xf32>
    %c0_2 = arith.constant 0 : index
    %c0_3 = arith.constant 0 : index
    %c0_4 = arith.constant 0 : index
    %2 = vector.load %arg3[%c0_2, %c0_3, %c0_4] : memref<1x128x32xf32, #tpu.memory_space<vmem>>, vector<1x128x32xf32>
    %3 = vector.shape_cast %2 : vector<1x128x32xf32> to vector<128x32xf32>
    %c0_5 = arith.constant 0 : index
    %c0_6 = arith.constant 0 : index
    %c0_7 = arith.constant 0 : index
    %4 = vector.load %arg4[%c0_5, %c0_6, %c0_7] : memref<1x128x128xf32, #tpu.memory_space<vmem>>, vector<1x128x128xf32>
    %5 = vector.shape_cast %4 : vector<1x128x128xf32> to vector<128x128xf32>
    %cst = arith.constant 0.176776692 : f32
    %6 = vector.broadcast %cst : f32 to vector<8x32xf32>
    %7 = arith.mulf %1, %6 : vector<8x32xf32>
    %cst_8 = arith.constant dense<0.000000e+00> : vector<8x128xf32>
    %8 = tpu.matmul %7, %3, %cst_8 {dimension_numbers = #tpu.dot_dimension_numbers<[1], [1], [0], [0], [0, 0, 1, 0], [], []>} : vector<8x32xf32>, vector<128x32xf32>, vector<8x128xf32> -> vector<8x128xf32>
    %9 = tpu.iota {dimensions = array<i32: 1>} : vector<8x128xi32>
    %c8_i32 = arith.constant 8 : i32
    %10 = vector.broadcast %c8_i32 : i32 to vector<8x128xi32>
    %11 = arith.cmpi slt, %9, %10 : vector<8x128xi32>
    %cst_9 = arith.constant -1.000000e+30 : f32
    %12 = vector.broadcast %cst_9 : f32 to vector<8x128xf32>
    %13 = arith.select %11, %8, %12 : vector<8x128xi1>, vector<8x128xf32>
    %cst_10 = arith.constant dense<0xFF800000> : vector<8xf32>
    %14 = vector.multi_reduction <maximumf>, %13, %cst_10 [1] : vector<8x128xf32> to vector<8xf32>
    %15 = vector.shape_cast %14 : vector<8xf32> to vector<8x1xf32>
    %16 = vector.broadcast %15 : vector<8x1xf32> to vector<8x128xf32>
    %17 = arith.subf %13, %16 : vector<8x128xf32>
    %18 = math.exp %17 : vector<8x128xf32>
    %cst_11 = arith.constant dense<0.000000e+00> : vector<8xf32>
    %19 = vector.multi_reduction <add>, %18, %cst_11 [1] : vector<8x128xf32> to vector<8xf32>
    %20 = vector.shape_cast %19 : vector<8xf32> to vector<8x1xf32>
    %21 = math.log %20 : vector<8x1xf32>
    %22 = vector.broadcast %21 : vector<8x1xf32> to vector<8x128xf32>
    %23 = arith.subf %17, %22 : vector<8x128xf32>
    %c0_12 = arith.constant 0 : index
    %c0_13 = arith.constant 0 : index
    %c0_14 = arith.constant 0 : index
    %24 = vector.load %arg7[%c0_12, %c0_13, %c0_14] : memref<1x8x128xf32, #tpu.memory_space<vmem>>, vector<1x8x128xf32>
    %25 = vector.shape_cast %24 : vector<1x8x128xf32> to vector<8x128xf32>
    %26 = vector.shape_cast %23 : vector<8x128xf32> to vector<1x8x128xf32>
    tpu.vector_store %arg7[%c0_12, %c0_13, %c0_14], %26 {strides = array<i32>} : memref<1x8x128xf32, #tpu.memory_space<vmem>>, vector<1x8x128xf32>,
    %27 = tpu.reciprocal %20 : vector<8x1xf32> -> vector<8x1xf32>
    %28 = vector.broadcast %27 : vector<8x1xf32> to vector<8x128xf32>
    %29 = arith.mulf %18, %28 : vector<8x128xf32>
    %c0_15 = arith.constant 0 : index
    %c0_16 = arith.constant 0 : index
    %c0_17 = arith.constant 0 : index
    %30 = vector.load %arg6[%c0_15, %c0_16, %c0_17] : memref<1x8x128xf32, #tpu.memory_space<vmem>>, vector<1x8x128xf32>
    %31 = vector.shape_cast %30 : vector<1x8x128xf32> to vector<8x128xf32>
    %32 = vector.shape_cast %29 : vector<8x128xf32> to vector<1x8x128xf32>
    tpu.vector_store %arg6[%c0_15, %c0_16, %c0_17], %32 {strides = array<i32>} : memref<1x8x128xf32, #tpu.memory_space<vmem>>, vector<1x8x128xf32>,
    %cst_18 = arith.constant dense<0.000000e+00> : vector<8x128xf32>
    %33 = tpu.matmul %29, %5, %cst_18 {dimension_numbers = #tpu.dot_dimension_numbers<[1], [0], [0], [1], [0, 0, 1, 1], [], []>} : vector<8x128xf32>, vector<128x128xf32>, vector<8x128xf32> -> vector<8x128xf32>
    %c0_19 = arith.constant 0 : index
    %c0_20 = arith.constant 0 : index
    %c0_21 = arith.constant 0 : index
    %34 = vector.load %arg5[%c0_19, %c0_20, %c0_21] : memref<1x8x128xf32, #tpu.memory_space<vmem>>, vector<1x8x128xf32>
    %35 = vector.shape_cast %34 : vector<1x8x128xf32> to vector<8x128xf32>
    %36 = vector.shape_cast %33 : vector<8x128xf32> to vector<1x8x128xf32>
    tpu.vector_store %arg5[%c0_19, %c0_20, %c0_21], %36 {strides = array<i32>} : memref<1x8x128xf32, #tpu.memory_space<vmem>>, vector<1x8x128xf32>,
    return
  }
  func.func @transform_0(%arg0: i32, %arg1: i32) -> (i32, i32, i32) {
    %c0_i32 = arith.constant 0 : i32
    %c0_i32_0 = arith.constant 0 : i32
    return %arg0, %arg1, %c0_i32 : i32, i32, i32
  }
  func.func @transform_1(%arg0: i32, %arg1: i32) -> (i32, i32, i32) {
    %c0_i32 = arith.constant 0 : i32
    %c0_i32_0 = arith.constant 0 : i32
    %c0_i32_1 = arith.constant 0 : i32
    return %arg0, %c0_i32, %c0_i32_0 : i32, i32, i32
  }
  func.func @transform_2(%arg0: i32, %arg1: i32) -> (i32, i32, i32) {
    %c0_i32 = arith.constant 0 : i32
    %c0_i32_0 = arith.constant 0 : i32
    %c0_i32_1 = arith.constant 0 : i32
    return %arg0, %c0_i32, %c0_i32_0 : i32, i32, i32
  }
  func.func @transform_3(%arg0: i32, %arg1: i32) -> (i32, i32, i32) {
    %c0_i32 = arith.constant 0 : i32
    %c0_i32_0 = arith.constant 0 : i32
    return %arg0, %arg1, %c0_i32 : i32, i32, i32
  }
  func.func @transform_4(%arg0: i32, %arg1: i32) -> (i32, i32, i32) {
    %c0_i32 = arith.constant 0 : i32
    %c0_i32_0 = arith.constant 0 : i32
    return %arg0, %arg1, %c0_i32 : i32, i32, i32
  }
  func.func @transform_5(%arg0: i32, %arg1: i32) -> (i32, i32, i32) {
    %c0_i32 = arith.constant 0 : i32
    %c0_i32_0 = arith.constant 0 : i32
    return %arg0, %arg1, %c0_i32 : i32, i32, i32
  }
}

</mosaic_0001>

<llo_original>
// kernel: tpu_custom_call.1
$region0: #{tpu_custom_call.1}
  #allocation0 [shape = 'u32[]', space=smem, size = 0x4, offset = 0x4, fixed_abs, tag = 'smem constant byte address 0x4 - core index']
  #allocation1 [shape = 'u32[72,128]{1,0:T(1,128)}', space=vmem, size = 0x9000, scoped, tag = 'internal scratch']
  %s0 = inlined_call_operand.vmem [shape: f32[2,8,32], index: 0, kind: input, shape index: {}]
  %s1 = inlined_call_operand.vmem [shape: f32[2,128,32], index: 1, kind: input, shape index: {}]
  %s2 = inlined_call_operand.vmem [shape: f32[2,128,128], index: 2, kind: input, shape index: {}]
  %s3 = inlined_call_operand.hbm [shape: f32[2,8,128], index: 3, kind: output, shape index: {0}]
  %s4 = inlined_call_operand.hbm [shape: f32[2,8,128], index: 4, kind: output, shape index: {1}]
  %s5 = inlined_call_operand.hbm [shape: f32[2,8,128], index: 5, kind: output, shape index: {2}]
  %6 = xla_tuple %s3, %s4, %s5
  %s7 = sld [smem:[#allocation0]]
  $region61: #{tpu_custom_call.1} parent=0
    _
  %s9 = ssub.s32 1, %s7
  %s10 = scalar_select 0, %s9, %s7
  $region1: #{tpu_custom_call.1} parent=0
    #allocation2 [shape = 'u8[8192]{0}', space=vmem, size = 0x2000, scoped, tag = 'output window, operand 0']
    #allocation3 [shape = 's32[2]{0}', space=sflag, size = 0x8, scoped, tag = 'scoped memory for tpu_custom_call.1']
    #allocation4 [shape = 'u8[8192]{0}', space=vmem, size = 0x2000, scoped, tag = 'output window, operand 1']
    #allocation5 [shape = 's32[2]{0}', space=sflag, size = 0x8, scoped, tag = 'scoped memory for tpu_custom_call.1']
    #allocation6 [shape = 'u8[8192]{0}', space=vmem, size = 0x2000, scoped, tag = 'output window, operand 2']
    %11 = vsyncpa [#allocation3], 0
    %s12 = scalar_lea.sflag [#allocation3], 1
    %13 = vsyncpa %s12, 0
    %14 = vsyncpa [#allocation5], 0
    %s15 = scalar_lea.sflag [#allocation5], 1
    %16 = vsyncpa %s15, 0
    loop: start=0, step=1, limit=4
    $region2: #{tpu_custom_call.1} parent=1 // loop_pre_header
      _
    $region3: #{tpu_custom_call.1} parent=1 // loop_header
      %s18 = sphi 0, %s22
      %p19 = scmp.ge.s32.totalorder %s18, 4
      %s25 = sphi 0, %s37
      %s26 = sphi 0, %s33
      %s27 = sphi 0, %s25
      %s28 = sphi 0, %s26
      %s29 = sphi 0, %s27
      %s30 = sphi 0, %s28
      %s42 = sphi 0, %s44
      %s45 = sphi 0, %s42
      %s46 = sphi 0, %s45
      %s62 = sphi 0, %s46
      %s68 = sphi 0, %s70
      %s71 = sphi 0, %s68
      %s72 = sphi 0, %s71
      %s88 = sphi 0, %s72
      %s94 = sphi 0, %s96
      %s97 = sphi 0, %s94
      %s98 = sphi 0, %s97
      %s114 = sphi 0, %s98
      %s122 = sphi 0, %s124
      %s125 = sphi 0, %s122
      %s126 = sphi 0, %s125
      %s142 = sphi 0, %s126
      %s150 = sphi 0, %s152
      %s153 = sphi 0, %s150
      %s154 = sphi 0, %s153
      %s170 = sphi 0, %s154
      %s178 = sphi 0, %s180
      %s181 = sphi 0, %s178
      %s182 = sphi 0, %s181
      %s198 = sphi 0, %s182
    $region4: #{tpu_custom_call.1} parent=1 // loop_header_branch
      %21 = sbr.rel (%p19) target = $region8
    $region5: #{tpu_custom_call.1} parent=1 // loop_body
      %s23 = ssub.s32 %s18, 1
      %s24 = ssub.s32 %s18, 2
      %s31 = sadd.s32 1, %s26
      %p32 = scmp.ge.s32.totalorder %s31, 1
      %s33 = scalar_select %p32, 0, %s31
      %s34 = sadd.s32 1, %s25
      %s35 = scalar_select %p32, %s34, %s25
      %p36 = scmp.ge.s32.totalorder %s35, 2
      %s37 = scalar_select %p36, 0, %s35
      %s38 = ssub.s32 %s25, %s37
      %s39 = ssub.s32 %s26, %s33
      %s40 = sor.u32 %s38, %s39
      %p41 = scmp.eq.s32.totalorder %s40, 0
      %s43 = sadd.s32 %s42, 1
      %s44 = scalar_select %p41, %s42, %s43
      %p47 = pneg %p41
      %p48 = scmp.eq.s32.totalorder %s18, 1
      %p49 = por %p47, %p48
      %p50 = scmp.ne.s32.totalorder %s42, %s45
      %p51 = scmp.eq.s32.totalorder %s18, 0
      %p52 = por %p50, %p51
      %p53 = scmp.ne.s32.totalorder %s42, %s45
      %p54 = scmp.eq.s32.totalorder %s23, 1
      %p55 = por %p53, %p54
      %p56 = scmp.ne.s32.totalorder %s45, %s46
      %p57 = scmp.eq.s32.totalorder %s23, 0
      %p58 = por %p56, %p57
      %p59 = scmp.ne.s32.totalorder %s45, %s46
      %p60 = scmp.eq.s32.totalorder %s24, 1
      %p61 = por %p59, %p60
      %p63 = scmp.ne.s32.totalorder %s46, %s62
      %p64 = scmp.eq.s32.totalorder %s24, 0
      %p65 = por %p63, %p64
      %s66 = ssub.s32 %s25, %s37
      %p67 = scmp.eq.s32.totalorder %s66, 0
      %s69 = sadd.s32 %s68, 1
      %s70 = scalar_select %p67, %s68, %s69
      %p73 = pneg %p67
      %p74 = scmp.eq.s32.totalorder %s18, 1
      %p75 = por %p73, %p74
      %p76 = scmp.ne.s32.totalorder %s68, %s71
      %p77 = scmp.eq.s32.totalorder %s18, 0
      %p78 = por %p76, %p77
      %p79 = scmp.ne.s32.totalorder %s68, %s71
      %p80 = scmp.eq.s32.totalorder %s23, 1
      %p81 = por %p79, %p80
      %p82 = scmp.ne.s32.totalorder %s71, %s72
      %p83 = scmp.eq.s32.totalorder %s23, 0
      %p84 = por %p82, %p83
      %p85 = scmp.ne.s32.totalorder %s71, %s72
      %p86 = scmp.eq.s32.totalorder %s24, 1
      %p87 = por %p85, %p86
      %p89 = scmp.ne.s32.totalorder %s72, %s88
      %p90 = scmp.eq.s32.totalorder %s24, 0
      %p91 = por %p89, %p90
      %s92 = ssub.s32 %s25, %s37
      %p93 = scmp.eq.s32.totalorder %s92, 0
      %s95 = sadd.s32 %s94, 1
      %s96 = scalar_select %p93, %s94, %s95
      %p99 = pneg %p93
      %p100 = scmp.eq.s32.totalorder %s18, 1
      %p101 = por %p99, %p100
      %p102 = scmp.ne.s32.totalorder %s94, %s97
      %p103 = scmp.eq.s32.totalorder %s18, 0
      %p104 = por %p102, %p103
      %p105 = scmp.ne.s32.totalorder %s94, %s97
      %p106 = scmp.eq.s32.totalorder %s23, 1
      %p107 = por %p105, %p106
      %p108 = scmp.ne.s32.totalorder %s97, %s98
      %p109 = scmp.eq.s32.totalorder %s23, 0
      %p110 = por %p108, %p109
      %p111 = scmp.ne.s32.totalorder %s97, %s98
      %p112 = scmp.eq.s32.totalorder %s24, 1
      %p113 = por %p111, %p112
      %p115 = scmp.ne.s32.totalorder %s98, %s114
      %p116 = scmp.eq.s32.totalorder %s24, 0
      %p117 = por %p115, %p116
      %s118 = ssub.s32 %s25, %s37
      %s119 = ssub.s32 %s26, %s33
      %s120 = sor.u32 %s118, %s119
      %p121 = scmp.eq.s32.totalorder %s120, 0
      %s123 = sadd.s32 %s122, 1
      %s124 = scalar_select %p121, %s122, %s123
      %p127 = pneg %p121
      %p128 = scmp.eq.s32.totalorder %s18, 1
      %p129 = por %p127, %p128
      %p130 = scmp.ne.s32.totalorder %s122, %s125
      %p131 = scmp.eq.s32.totalorder %s18, 0
      %p132 = por %p130, %p131
      %p133 = scmp.ne.s32.totalorder %s122, %s125
      %p134 = scmp.eq.s32.totalorder %s23, 1
      %p135 = por %p133, %p134
      %p136 = scmp.ne.s32.totalorder %s125, %s126
      %p137 = scmp.eq.s32.totalorder %s23, 0
      %p138 = por %p136, %p137
      %p139 = scmp.ne.s32.totalorder %s125, %s126
      %p140 = scmp.eq.s32.totalorder %s24, 1
      %p141 = por %p139, %p140
      %p143 = scmp.ne.s32.totalorder %s126, %s142
      %p144 = scmp.eq.s32.totalorder %s24, 0
      %p145 = por %p143, %p144
      %s146 = ssub.s32 %s25, %s37
      %s147 = ssub.s32 %s26, %s33
      %s148 = sor.u32 %s146, %s147
      %p149 = scmp.eq.s32.totalorder %s148, 0
      %s151 = sadd.s32 %s150, 1
      %s152 = scalar_select %p149, %s150, %s151
      %p155 = pneg %p149
      %p156 = scmp.eq.s32.totalorder %s18, 1
      %p157 = por %p155, %p156
      %p158 = scmp.ne.s32.totalorder %s150, %s153
      %p159 = scmp.eq.s32.totalorder %s18, 0
      %p160 = por %p158, %p159
      %p161 = scmp.ne.s32.totalorder %s150, %s153
      %p162 = scmp.eq.s32.totalorder %s23, 1
      %p163 = por %p161, %p162
      %p164 = scmp.ne.s32.totalorder %s153, %s154
      %p165 = scmp.eq.s32.totalorder %s23, 0
      %p166 = por %p164, %p165
      %p167 = scmp.ne.s32.totalorder %s153, %s154
      %p168 = scmp.eq.s32.totalorder %s24, 1
      %p169 = por %p167, %p168
      %p171 = scmp.ne.s32.totalorder %s154, %s170
      %p172 = scmp.eq.s32.totalorder %s24, 0
      %p173 = por %p171, %p172
      %s174 = ssub.s32 %s25, %s37
      %s175 = ssub.s32 %s26, %s33
      %s176 = sor.u32 %s174, %s175
      %p177 = scmp.eq.s32.totalorder %s176, 0
      %s179 = sadd.s32 %s178, 1
      %s180 = scalar_select %p177, %s178, %s179
      %p183 = pneg %p177
      %p184 = scmp.eq.s32.totalorder %s18, 1
      %p185 = por %p183, %p184
      %p186 = scmp.ne.s32.totalorder %s178, %s181
      %p187 = scmp.eq.s32.totalorder %s18, 0
      %p188 = por %p186, %p187
      %p189 = scmp.ne.s32.totalorder %s178, %s181
      %p190 = scmp.eq.s32.totalorder %s23, 1
      %p191 = por %p189, %p190
      %p192 = scmp.ne.s32.totalorder %s181, %s182
      %p193 = scmp.eq.s32.totalorder %s23, 0
      %p194 = por %p192, %p193
      %p195 = scmp.ne.s32.totalorder %s181, %s182
      %p196 = scmp.eq.s32.totalorder %s24, 1
      %p197 = por %p195, %p196
      %p199 = scmp.ne.s32.totalorder %s182, %s198
      %p200 = scmp.eq.s32.totalorder %s24, 0
      %p201 = por %p199, %p200
      %p202 = scmp.le.s32.totalorder 1, %s18
      %p203 = scmp.lt.s32.totalorder %s18, 3
      %p204 = pnand %p202, %p203
      %p205 = pneg %p204
      // Predicated region
      $region9: #{tpu_custom_call.1} parent=5 // pred_check
        _
      $region10: #{tpu_custom_call.1} parent=5 // pred_check_branch
        %207 = sbr.rel (%p204) target = $region12
      $region11: #{tpu_custom_call.1} parent=5 // pred_region
        %s208 = ssub.s32 %s18, 1
      $region12: #{tpu_custom_call.1} parent=5 // pred_fallthru
        _
      %p209 = scmp.lt.s32.totalorder %s18, 2
      // Predicated region
      $region13: #{tpu_custom_call.1} parent=5 // pred_check
        %p210 = pneg %p209
      $region14: #{tpu_custom_call.1} parent=5 // pred_check_branch
        %212 = sbr.rel (%p210) target = $region16
      $region15: #{tpu_custom_call.1} parent=5 // pred_region
        // Predicated region
        $region17: #{tpu_custom_call.1} parent=15 // pred_check
          %p213 = pneg %p52
        $region18: #{tpu_custom_call.1} parent=15 // pred_check_branch
          %215 = sbr.rel (%p213) target = $region20
        $region19: #{tpu_custom_call.1} parent=15 // pred_region
          %p216 = scmp.lt.s32.totalorder %s25, 1
          %s217 = scalar_select %p216, %s25, 1
          %p218 = scmp.lt.s32.totalorder %s26, 0
          %s219 = scalar_select %p218, %s26, 0
          %s220 = sadd.s32 %s219, %s217
          %s221 = smul.addr %s220, 8
          %s222 = scalar_lea.vmem %s0, %s221
        $region20: #{tpu_custom_call.1} parent=15 // pred_fallthru
          _
        // Predicated region
        $region21: #{tpu_custom_call.1} parent=15 // pred_check
          %p223 = pneg %p78
        $region22: #{tpu_custom_call.1} parent=15 // pred_check_branch
          %225 = sbr.rel (%p223) target = $region24
        $region23: #{tpu_custom_call.1} parent=15 // pred_region
          %p226 = scmp.lt.s32.totalorder %s25, 1
          %s227 = scalar_select %p226, %s25, 1
          %s228 = smul.addr %s227, 16
          %s229 = smul.addr %s228, 8
          %s230 = scalar_lea.vmem %s1, %s229
        $region24: #{tpu_custom_call.1} parent=15 // pred_fallthru
          _
        // Predicated region
        $region25: #{tpu_custom_call.1} parent=15 // pred_check
          %p231 = pneg %p104
        $region26: #{tpu_custom_call.1} parent=15 // pred_check_branch
          %233 = sbr.rel (%p231) target = $region28
        $region27: #{tpu_custom_call.1} parent=15 // pred_region
          %p234 = scmp.lt.s32.totalorder %s25, 1
          %s235 = scalar_select %p234, %s25, 1
          %s236 = smul.addr %s235, 16
          %s237 = smul.addr %s236, 8
          %s238 = scalar_lea.vmem %s2, %s237
        $region28: #{tpu_custom_call.1} parent=15 // pred_fallthru
          _
      $region16: #{tpu_custom_call.1} parent=5 // pred_fallthru
        _
      %p239 = scmp.le.s32.totalorder 1, %s18
      %p240 = scmp.lt.s32.totalorder %s18, 3
      %p241 = pnand %p239, %p240
      %p242 = pneg %p241
      // Predicated region
      $region29: #{tpu_custom_call.1} parent=5 // pred_check
        _
      $region30: #{tpu_custom_call.1} parent=5 // pred_check_branch
        %244 = sbr.rel (%p241) target = $region32
      $region31: #{tpu_custom_call.1} parent=5 // pred_region
        %s245 = ssub.s32 %s18, 1
        %p246 = scmp.lt.s32.totalorder %s27, 1
        %s247 = scalar_select %p246, %s27, 1
        %p248 = scmp.lt.s32.totalorder %s28, 0
        %s249 = scalar_select %p248, %s28, 0
        %s250 = sadd.s32 %s249, %s247
        %s251 = smul.addr %s250, 8
        %s252 = scalar_lea.vmem %s0, %s251
        %p253 = pneg %p58
        %p254 = pneg %p55
        %p255 = scmp.lt.s32.totalorder %s27, 1
        %s256 = scalar_select %p255, %s27, 1
        %s257 = smul.addr %s256, 16
        %s258 = smul.addr %s257, 8
        %s259 = scalar_lea.vmem %s1, %s258
        %p260 = pneg %p84
        %p261 = pneg %p81
        %p262 = scmp.lt.s32.totalorder %s27, 1
        %s263 = scalar_select %p262, %s27, 1
        %s264 = smul.addr %s263, 16
        %s265 = smul.addr %s264, 8
        %s266 = scalar_lea.vmem %s2, %s265
        %p267 = pneg %p110
        %p268 = pneg %p107
        %p269 = pneg %p138
        %p270 = pneg %p135
        %s271 = sand.u32 %s125, 1
        %s272 = scalar_lea.sflag [#allocation3], %s271
        %s273 = sand.u32 %s125, 1
        %s274 = smul.addr %s273, 8
        %s275 = scalar_lea.vmem [#allocation2], %s274
        %p276 = pneg %p166
        %p277 = pneg %p163
        %s278 = sand.u32 %s23, 1
        %s279 = scalar_lea.sflag [#allocation5], %s278
        %s280 = sand.u32 %s153, 1
        %s281 = smul.addr %s280, 8
        %s282 = scalar_lea.vmem [#allocation4], %s281
        %p283 = pneg %p194
        %p284 = pneg %p191
        %s285 = sand.u32 %s23, 1
        %s286 = scalar_lea.sflag [#allocation5], %s285
        %s287 = sand.u32 %s181, 1
        %s288 = smul.addr %s287, 8
        %s289 = scalar_lea.vmem [#allocation6], %s288
        %p290 = scmp.lt.s32.totalorder %s27, 1
        %s291 = scalar_select %p290, %s27, 1
        %p292 = scmp.lt.s32.totalorder %s28, 0
        %s293 = scalar_select %p292, %s28, 0
        %s294 = sadd.s32 %s293, %s291
        %s295 = smul.addr %s294, 8
        %s296 = scalar_lea.vmem %s0, %s295
        %p297 = scmp.lt.s32.totalorder %s27, 1
        %s298 = scalar_select %p297, %s27, 1
        %s299 = smul.addr %s298, 16
        %s300 = smul.addr %s299, 8
        %s301 = scalar_lea.vmem %s1, %s300
        %p302 = scmp.lt.s32.totalorder %s27, 1
        %s303 = scalar_select %p302, %s27, 1
        %s304 = smul.addr %s303, 16
        %s305 = smul.addr %s304, 8
        %s306 = scalar_lea.vmem %s2, %s305
        %v307 = vld [vmem:[%s296] sm:$0xff]
        %v308 = vld [vmem:[%s301] sm:$0xff]
        %v309 = vld [vmem:[%s301 + $0x8] sm:$0xff]
        %v310 = vld [vmem:[%s301 + $0x10] sm:$0xff]
        %v311 = vld [vmem:[%s301 + $0x18] sm:$0xff]
        %v312 = vld [vmem:[%s301 + $0x20] sm:$0xff]
        %v313 = vld [vmem:[%s301 + $0x28] sm:$0xff]
        %v314 = vld [vmem:[%s301 + $0x30] sm:$0xff]
        %v315 = vld [vmem:[%s301 + $0x38] sm:$0xff]
        %v316 = vld [vmem:[%s301 + $0x40] sm:$0xff]
        %v317 = vld [vmem:[%s301 + $0x48] sm:$0xff]
        %v318 = vld [vmem:[%s301 + $0x50] sm:$0xff]
        %v319 = vld [vmem:[%s301 + $0x58] sm:$0xff]
        %v320 = vld [vmem:[%s301 + $0x60] sm:$0xff]
        %v321 = vld [vmem:[%s301 + $0x68] sm:$0xff]
        %v322 = vld [vmem:[%s301 + $0x70] sm:$0xff]
        %v323 = vld [vmem:[%s301 + $0x78] sm:$0xff]
        %v324 = vld [vmem:[%s306] sm:$0xff]
        %v325 = vld [vmem:[%s306 + $0x8] sm:$0xff]
        %v326 = vld [vmem:[%s306 + $0x10] sm:$0xff]
        %v327 = vld [vmem:[%s306 + $0x18] sm:$0xff]
        %v328 = vld [vmem:[%s306 + $0x20] sm:$0xff]
        %v329 = vld [vmem:[%s306 + $0x28] sm:$0xff]
        %v330 = vld [vmem:[%s306 + $0x30] sm:$0xff]
        %v331 = vld [vmem:[%s306 + $0x38] sm:$0xff]
        %v332 = vld [vmem:[%s306 + $0x40] sm:$0xff]
        %v333 = vld [vmem:[%s306 + $0x48] sm:$0xff]
        %v334 = vld [vmem:[%s306 + $0x50] sm:$0xff]
        %v335 = vld [vmem:[%s306 + $0x58] sm:$0xff]
        %v336 = vld [vmem:[%s306 + $0x60] sm:$0xff]
        %v337 = vld [vmem:[%s306 + $0x68] sm:$0xff]
        %v338 = vld [vmem:[%s306 + $0x70] sm:$0xff]
        %v339 = vld [vmem:[%s306 + $0x78] sm:$0xff]
        %v340 = vmul.f32 %v307, 0.17677669
        %vm341 = vcmask 261120
        %v343 = vsel %vm341, %v340, 0
        %v346 = vsel %vm341, %v308, 0
        %v349 = vsel %vm341, %v309, 0
        %v352 = vsel %vm341, %v310, 0
        %v355 = vsel %vm341, %v311, 0
        %v358 = vsel %vm341, %v312, 0
        %v361 = vsel %vm341, %v313, 0
        %v364 = vsel %vm341, %v314, 0
        %v367 = vsel %vm341, %v315, 0
        %v370 = vsel %vm341, %v316, 0
        %v373 = vsel %vm341, %v317, 0
        %v376 = vsel %vm341, %v318, 0
        %v379 = vsel %vm341, %v319, 0
        %v382 = vsel %vm341, %v320, 0
        %v385 = vsel %vm341, %v321, 0
        %v388 = vsel %vm341, %v322, 0
        %v391 = vsel %vm341, %v323, 0
        %393 = vmatpush.xpose.msra.mxu0 %v391
        %394 = vmatpush.xpose.msra.mxu0 %v388
        %395 = vmatpush.xpose.msra.mxu0 %v385
        %396 = vmatpush.xpose.msra.mxu0 %v382
        %397 = vmatpush.xpose.msra.mxu0 %v379
        %398 = vmatpush.xpose.msra.mxu0 %v376
        %399 = vmatpush.xpose.msra.mxu0 %v373
        %400 = vmatpush.xpose.msra.mxu0 %v370
        %401 = vmatpush.xpose.msra.mxu0 %v367
        %402 = vmatpush.xpose.msra.mxu0 %v364
        %403 = vmatpush.xpose.msra.mxu0 %v361
        %404 = vmatpush.xpose.msra.mxu0 %v358
        %405 = vmatpush.xpose.msra.mxu0 %v355
        %406 = vmatpush.xpose.msra.mxu0 %v352
        %407 = vmatpush.xpose.msra.mxu0 %v349
        %408 = vmatpush.xpose.msra.mxu0 %v346
        %409 = vmatmul.f32.gmra.mxu0 %v343
        %v410 = vpop.f32.mrf.mxu0
        %v411 = vadd.f32 0.0, %v410
        %412 = vdwg.mxu0
        %v413 = vlaneseq
        %v414 = vand.u32 %v413, 127
        %vm415 = vcmp.lt.s32.totalorder %v414, 8
        %v416 = vsel %vm415, %v411, -1e+30
        %417 = vmax.xlane.f32.xlu0 %v416
        %v418 = vpop.xlane.xlu0 %417
        %v419 = vsub.f32 %v416, %v418
        %v420 = vmul.f32 %v419, 1.442695
        %v421 = vpow.pop %v420
        %422 = vadd.xlane.f32.xlu0 %v421
        %v423 = vpop.xlane.xlu0 %422
        %v424 = vlog2.pop %v423
        %v425 = vmul.f32 %v424, 0.6931472
        %v426 = vsub.f32 %v419, %v425
        %427 = vst [vmem:[%s289] sm:$0xff] %v426
        %v428 = vrcp.pop %v423
        %v429 = vmul.f32 %v423, %v428
        %v430 = vsub.f32 1.0, %v429
        %v431 = vmul.f32 %v428, %v430
        %v432 = vadd.f32 %v428, %v431
        %vm433 = vweird.f32 %v423
        %vm434 = vweird.f32 %v428
        %vm435 = vmor %vm433, %vm434
        %v436 = vsel %vm435, %v428, %v432
        %v437 = vand.u32 2147483647, %v423
        %vm438 = vcmp.eq.f32.partialorder %v437, 8.507059e+37
        %v439 = vand.u32 %v423, 2147483648
        %v440 = vor.u32 1.1754944e-38, %v439
        %v441 = vsel %vm438, %v440, %v436
        %v442 = vmul.f32 %v421, %v441
        %443 = vst [vmem:[%s282] sm:$0xff] %v442
        %444 = vmatpush.msra.mxu0 %v339
        %445 = vmatpush.msra.mxu0 %v338
        %446 = vmatpush.msra.mxu0 %v337
        %447 = vmatpush.msra.mxu0 %v336
        %448 = vmatpush.msra.mxu0 %v335
        %449 = vmatpush.msra.mxu0 %v334
        %450 = vmatpush.msra.mxu0 %v333
        %451 = vmatpush.msra.mxu0 %v332
        %452 = vmatpush.msra.mxu0 %v331
        %453 = vmatpush.msra.mxu0 %v330
        %454 = vmatpush.msra.mxu0 %v329
        %455 = vmatpush.msra.mxu0 %v328
        %456 = vmatpush.msra.mxu0 %v327
        %457 = vmatpush.msra.mxu0 %v326
        %458 = vmatpush.msra.mxu0 %v325
        %459 = vmatpush.msra.mxu0 %v324
        %460 = vmatmul.f32.gmra.mxu0 %v442
        %v461 = vpop.f32.mrf.mxu0
        %v462 = vadd.f32 0.0, %v461
        %463 = vdwg.mxu0
        %464 = vst [vmem:[%s275] sm:$0xff] %v462
        %s465 = sand.u32 %s125, 1
        %s466 = scalar_lea.sflag [#allocation3], %s465
        %s467 = sand.u32 %s125, 1
        %s468 = smul.addr %s467, 8
        %s469 = scalar_lea.vmem [#allocation2], %s468
        %s470 = sand.u32 %s23, 1
        %s471 = scalar_lea.sflag [#allocation5], %s470
        %s472 = sand.u32 %s153, 1
        %s473 = smul.addr %s472, 8
        %s474 = scalar_lea.vmem [#allocation4], %s473
        %s475 = sand.u32 %s23, 1
        %s476 = scalar_lea.sflag [#allocation5], %s475
        %s477 = sand.u32 %s181, 1
        %s478 = smul.addr %s477, 8
        %s479 = scalar_lea.vmem [#allocation6], %s478
        // Predicated region
        $region33: #{tpu_custom_call.1} parent=31 // pred_check
          %p480 = pneg %p135
        $region34: #{tpu_custom_call.1} parent=31 // pred_check_branch
          %482 = sbr.rel (%p480) target = $region36
        $region35: #{tpu_custom_call.1} parent=31 // pred_region
          %484 = vsyncadd %s466, 0
          %s485 = sadd.s32 %s28, %s27
          %s486 = smul.addr %s485, 8
          %s487 = scalar_lea.hbm %s3, %s486
          %s489 = sshll.u32 %s469, 4
          %s490 = int_to_ptr.vmem [resolvable:$true] %s489
          %s491 = sshll.u32 %s487, 4
          %s492 = int_to_ptr.hbm [resolvable:$true] %s491
          %494 = dma.vmem_to_hbm [thread:$0]  %s490, 128, %s492, %s466
        $region36: #{tpu_custom_call.1} parent=31 // pred_fallthru
          _
        // Predicated region
        $region37: #{tpu_custom_call.1} parent=31 // pred_check
          %p495 = pneg %p163
        $region38: #{tpu_custom_call.1} parent=31 // pred_check_branch
          %497 = sbr.rel (%p495) target = $region40
        $region39: #{tpu_custom_call.1} parent=31 // pred_region
          %499 = vsyncadd %s471, 0
          %s500 = sadd.s32 %s28, %s27
          %s501 = smul.addr %s500, 8
          %s502 = scalar_lea.hbm %s4, %s501
          %s504 = sshll.u32 %s474, 4
          %s505 = int_to_ptr.vmem [resolvable:$true] %s504
          %s506 = sshll.u32 %s502, 4
          %s507 = int_to_ptr.hbm [resolvable:$true] %s506
          %509 = dma.vmem_to_hbm [thread:$0]  %s505, 128, %s507, %s471
        $region40: #{tpu_custom_call.1} parent=31 // pred_fallthru
          _
        // Predicated region
        $region41: #{tpu_custom_call.1} parent=31 // pred_check
          %p510 = pneg %p191
        $region42: #{tpu_custom_call.1} parent=31 // pred_check_branch
          %512 = sbr.rel (%p510) target = $region44
        $region43: #{tpu_custom_call.1} parent=31 // pred_region
          %514 = vsyncadd %s476, 0
          %s515 = sadd.s32 %s28, %s27
          %s516 = smul.addr %s515, 8
          %s517 = scalar_lea.hbm %s5, %s516
          %s519 = sshll.u32 %s479, 4
          %s520 = int_to_ptr.vmem [resolvable:$true] %s519
          %s521 = sshll.u32 %s517, 4
          %s522 = int_to_ptr.hbm [resolvable:$true] %s521
          %524 = dma.vmem_to_hbm [thread:$0]  %s520, 128, %s522, %s476
        $region44: #{tpu_custom_call.1} parent=31 // pred_fallthru
          _
      $region32: #{tpu_custom_call.1} parent=5 // pred_fallthru
        _
      %p525 = scmp.le.s32.totalorder 2, %s18
      // Predicated region
      $region45: #{tpu_custom_call.1} parent=5 // pred_check
        %p526 = pneg %p525
      $region46: #{tpu_custom_call.1} parent=5 // pred_check_branch
        %528 = sbr.rel (%p526) target = $region48
      $region47: #{tpu_custom_call.1} parent=5 // pred_region
        %s529 = ssub.s32 %s18, 2
        // Predicated region
        $region49: #{tpu_custom_call.1} parent=47 // pred_check
          %p530 = pneg %p141
        $region50: #{tpu_custom_call.1} parent=47 // pred_check_branch
          %532 = sbr.rel (%p530) target = $region52
        $region51: #{tpu_custom_call.1} parent=47 // pred_region
          %s533 = sand.u32 %s126, 1
          %s534 = scalar_lea.sflag [#allocation3], %s533
          %s535 = sand.u32 %s126, 1
          %s536 = smul.addr %s535, 8
          %s537 = scalar_lea.vmem [#allocation2], %s536
          %539 = dma.done %s534, 128
        $region52: #{tpu_custom_call.1} parent=47 // pred_fallthru
          _
        // Predicated region
        $region53: #{tpu_custom_call.1} parent=47 // pred_check
          %p540 = pneg %p169
        $region54: #{tpu_custom_call.1} parent=47 // pred_check_branch
          %542 = sbr.rel (%p540) target = $region56
        $region55: #{tpu_custom_call.1} parent=47 // pred_region
          %s543 = sand.u32 %s24, 1
          %s544 = scalar_lea.sflag [#allocation5], %s543
          %s545 = sand.u32 %s154, 1
          %s546 = smul.addr %s545, 8
          %s547 = scalar_lea.vmem [#allocation4], %s546
          %549 = dma.done %s544, 128
        $region56: #{tpu_custom_call.1} parent=47 // pred_fallthru
          _
        // Predicated region
        $region57: #{tpu_custom_call.1} parent=47 // pred_check
          %p550 = pneg %p197
        $region58: #{tpu_custom_call.1} parent=47 // pred_check_branch
          %552 = sbr.rel (%p550) target = $region60
        $region59: #{tpu_custom_call.1} parent=47 // pred_region
          %s553 = sand.u32 %s24, 1
          %s554 = scalar_lea.sflag [#allocation5], %s553
          %s555 = sand.u32 %s182, 1
          %s556 = smul.addr %s555, 8
          %s557 = scalar_lea.vmem [#allocation6], %s556
          %559 = dma.done %s554, 128
        $region60: #{tpu_custom_call.1} parent=47 // pred_fallthru
          _
      $region48: #{tpu_custom_call.1} parent=5 // pred_fallthru
        _
    $region6: #{tpu_custom_call.1} parent=1 // loop_footer
      %s22 = sadd.s32 1, %s18
    $region7: #{tpu_custom_call.1} parent=1 // loop_footer_branch
      %17 = sbr.rel target = $region3
    $region8: #{tpu_custom_call.1} parent=1 // loop_exit
      _
    %560 = vsyncpa [#allocation3], 1
    %s561 = scalar_lea.sflag [#allocation3], 1
    %562 = vsyncpa %s561, 1
    %563 = vsyncpa [#allocation5], 1
    %s564 = scalar_lea.sflag [#allocation5], 1
    %565 = vsyncpa %s564, 1

</llo_original>
